<compile_context>
chip_gen: v7x
topology: tpu7x:2x2x1
jax: 0.10.0
libtpu: 0.0.40
codegen_flags: <defaults>
</compile_context>

<pallas_src>
import functools

import jax
import jax.numpy as jnp
import numpy as np
from jax.experimental import pallas as pl
from jax.experimental.pallas import tpu as pltpu


def _assemble_kernel(ids_hbm, table_hbm, prompt_ref, out_ref,
                     ids_smem, gather_sem, ids_sem,
                     *, S, TS, NT, PLEN, prompt_first):
    """Grid = (B, NT); the (1, S+PLEN, D) output block is VMEM-resident across t.

    ids_hbm:    (B, S)  int32, HBM (pl.ANY)    token ids
    table_hbm:  (V, D)  HBM (pl.ANY)           embedding table
    prompt_ref: (PLEN, D) VMEM                 pre-interleaved [fix_0, learn_0, ...]
    out_ref:    (1, S+PLEN, D) VMEM            output block for this batch row
    ids_smem:   (S,) int32 SMEM scratch        this batch row's ids
    gather_sem: DMA sem (2,)                   per-tile-parity gather semaphores
    ids_sem:    DMA sem                        ids-row fetch semaphore
    """
    b = pl.program_id(0)
    t = pl.program_id(1)
    slot = jax.lax.rem(t, 2)

    in_off = PLEN if prompt_first else 0       # 'left_concat' vs 'right_concat'
    pr_off = 0 if prompt_first else S
    n_last = S - (NT - 1) * TS                 # rows in the (maybe ragged) last tile

    # Once per batch row: kick off the ids-row fetch, write the prompt slab with
    # one contiguous lane-dense store (overlapping the ids DMA), then wait.
    @pl.when(t == 0)
    def _():
        ids_cp = pltpu.make_async_copy(ids_hbm.at[b], ids_smem, ids_sem)
        ids_cp.start()
        out_ref[0, pr_off:pr_off + PLEN, :] = prompt_ref[...]
        ids_cp.wait()

    # Issue this tile's row gathers: DMA table rows from HBM straight into the
    # output block.  Fully unrolled (static trip count) so the scheduler can
    # co-issue id load, address math and descriptor push.
    def issue_rows(count, base):
        for s in range(count):
            tok = ids_smem[base + s]
            pltpu.make_async_copy(
                table_hbm.at[pl.ds(tok, 1), :],
                out_ref.at[0, pl.ds(in_off + base + s, 1), :],
                gather_sem.at[slot]).start()

    if n_last == TS:                                      # every tile is full
        issue_rows(TS, pl.multiple_of(t * TS, TS))
    else:
        @pl.when(t < NT - 1)
        def _():
            issue_rows(TS, pl.multiple_of(t * TS, TS))

        @pl.when(t == NT - 1)
        def _():
            issue_rows(n_last, (NT - 1) * TS)             # static base & count

    # Deferred, aggregated wait for the PREVIOUS tile (always TS full rows):
    # DMA semaphores count bytes, so a single (TS, D) wait descriptor whose
    # destination is exactly the previously-issued rows drains all TS row
    # copies at once, while this tile's gathers are already in flight.
    # (The source borrows table rows [0, TS) purely for the byte count.)
    @pl.when(t > 0)
    def _():
        pltpu.make_async_copy(
            table_hbm.at[pl.ds(0, TS), :],
            out_ref.at[0, pl.ds(in_off + (t - 1) * TS, TS), :],
            gather_sem.at[1 - slot]).wait()

    # Final drain: the last tile waits for its own (static-count) rows so the
    # block is complete before Pallas writes it back to HBM.
    @pl.when(t == NT - 1)
    def _():
        pltpu.make_async_copy(
            table_hbm.at[pl.ds(0, n_last), :],
            out_ref.at[0, pl.ds(in_off + (NT - 1) * TS, n_last), :],
            gather_sem.at[slot]).wait()


def modular_prompt_forward(input_ids, attention_mask, target_ids,
                           emb_table, prompt_fix, prompt_learn,
                           *, pad_token_id=0, concat_mode="right_concat",
                           seq_tile=256):
    """JAX wrapper reproducing T5ModularPrompt.forward up to the T5 call."""
    B, S = input_ids.shape
    V, D = emb_table.shape
    L, P, _ = prompt_fix.shape
    PLEN = 2 * L * P
    T = S + PLEN
    prompt_first = (concat_mode == "left_concat")

    TS = int(min(seq_tile, S))
    NT = (S + TS - 1) // TS

    # OOB guard: a bad id must never become an out-of-bounds HBM gather.
    ids = jnp.clip(input_ids.astype(jnp.int32), 0, V - 1)

    # Pre-interleave the per-label prompts: [fix_0, learn_0, fix_1, learn_1, ...]
    prompt_slab = jnp.stack([prompt_fix, prompt_learn], axis=1).reshape(PLEN, D)
    prompt_slab = prompt_slab.astype(emb_table.dtype)

    # VMEM budget: double-buffered resident output block + prompt slab, with
    # generous headroom.  TODO(synk): at T5-XXL scale on v7x (64 MiB VMEM),
    # tile the output over T instead of keeping it resident (and mark both
    # grid axes 'parallel' so both TensorCores participate at small batch).
    itemsize = np.dtype(emb_table.dtype).itemsize
    vmem_need = 2 * (T * D + PLEN * D) * itemsize
    vmem_limit = int(min(100 * 1024 * 1024,
                         max(32 * 1024 * 1024, 2 * vmem_need + (4 << 20))))

    kernel = functools.partial(_assemble_kernel, S=S, TS=TS, NT=NT, PLEN=PLEN,
                               prompt_first=prompt_first)

    allembedding = pl.pallas_call(
        kernel,
        out_shape=jax.ShapeDtypeStruct((B, T, D), emb_table.dtype),
        grid_spec=pltpu.PrefetchScalarGridSpec(
            num_scalar_prefetch=0,
            grid=(B, NT),
            in_specs=[
                pl.BlockSpec(memory_space=pl.ANY),               # ids stay in HBM
                pl.BlockSpec(memory_space=pl.ANY),               # table stays in HBM
                pl.BlockSpec((PLEN, D), lambda b, t: (0, 0)),    # grid-invariant slab
            ],
            out_specs=pl.BlockSpec((1, T, D), lambda b, t: (b, 0, 0)),
            scratch_shapes=[
                pltpu.SMEM((S,), jnp.int32),        # this batch row's token ids
                pltpu.SemaphoreType.DMA((2,)),      # per-parity gather semaphores
                pltpu.SemaphoreType.DMA,            # ids-row fetch semaphore
            ],
        ),
        compiler_params=pltpu.CompilerParams(
            dimension_semantics=("parallel", "arbitrary"),
            vmem_limit_bytes=vmem_limit),
    )(ids, emb_table, prompt_slab)

    # Attention-mask concat (prompt mask is all ones on this path) — int glue,
    # 1/D the bytes of the embedding assembly.
    mask_prompt = jnp.ones((B, PLEN), dtype=attention_mask.dtype)
    if prompt_first:
        all_attention_mask = jnp.concatenate([mask_prompt, attention_mask], axis=1)
    else:
        all_attention_mask = jnp.concatenate([attention_mask, mask_prompt], axis=1)

    # lm_labels[lm_labels == pad] = -100  (elementwise glue)
    lm_labels = jnp.where(target_ids == pad_token_id, -100, target_ids)

    # TODO(synk): the underlying HuggingFace T5 encoder-decoder forward
    # (self.model(inputs_embeds=..., labels=...) -> loss), tokenizer decode /
    # generate, and the host-side random prompt subset/order shuffling are
    # external components with no single-kernel Pallas equivalent; we return
    # the kernel-assembled (inputs_embeds, attention_mask, labels).
    return allembedding, all_attention_mask, lm_labels


if __name__ == "__main__":
    # Small, deterministic synthetic setup.
    B, S, V, D = 2, 8, 64, 32        # batch, input seq, vocab, d_model
    L, P = 3, 4                      # 3 label prompts, 4 tokens each (fix + learnable)
    PAD = 0

    key = jax.random.PRNGKey(0)
    k1, k2, k3, k4 = jax.random.split(key, 4)
    emb_table = jax.random.normal(k1, (V, D), jnp.float32) * 0.02
    prompt_fix = jax.random.normal(k2, (L, P, D), jnp.float32) * 0.5
    prompt_learn = jax.random.normal(k3, (L, P, D), jnp.float32) * 0.5

    input_ids = jax.random.randint(k4, (B, S), 1, V).astype(jnp.int32)
    attention_mask = jnp.ones((B, S), jnp.int32)
    target_ids = jnp.array([[5, 6, 7, 0, 0, 0, 0, 0],
                            [9, 3, 0, 0, 0, 0, 0, 0]], jnp.int32)

    # --- pure-JAX reference ---
    ref_input_emb = emb_table[input_ids]                                   # (B, S, D)
    ref_prompt = jnp.stack([prompt_fix, prompt_learn], axis=1).reshape(2 * L * P, D)
    ref_prompt_rep = jnp.broadcast_to(ref_prompt[None], (B,) + ref_prompt.shape)
    ones_mask = jnp.ones((B, 2 * L * P), attention_mask.dtype)
    ref_labels = jnp.where(target_ids == PAD, -100, target_ids)
    ref_right = jnp.concatenate([ref_input_emb, ref_prompt_rep], axis=1)
    ref_left = jnp.concatenate([ref_prompt_rep, ref_input_emb], axis=1)
    ref_mask_right = jnp.concatenate([attention_mask, ones_mask], axis=1)
    ref_mask_left = jnp.concatenate([ones_mask, attention_mask], axis=1)

    # 1) right_concat, single sequence tile (TS == S).
    allemb, allmask, lm_labels = modular_prompt_forward(
        input_ids, attention_mask, target_ids,
        emb_table, prompt_fix, prompt_learn,
        pad_token_id=PAD, concat_mode="right_concat")
    jax.block_until_ready(allemb)
    assert allemb.shape == (B, S + 2 * L * P, D)
    np.testing.assert_allclose(np.asarray(allemb), np.asarray(ref_right),
                               rtol=1e-6, atol=1e-6)
    np.testing.assert_array_equal(np.asarray(allmask), np.asarray(ref_mask_right))
    np.testing.assert_array_equal(np.asarray(lm_labels), np.asarray(ref_labels))

    # 2) left_concat.
    allemb_l, allmask_l, _ = modular_prompt_forward(
        input_ids, attention_mask, target_ids,
        emb_table, prompt_fix, prompt_learn,
        pad_token_id=PAD, concat_mode="left_concat")
    jax.block_until_ready(allemb_l)
    np.testing.assert_allclose(np.asarray(allemb_l), np.asarray(ref_left),
                               rtol=1e-6, atol=1e-6)
    np.testing.assert_array_equal(np.asarray(allmask_l), np.asarray(ref_mask_left))

    # 3) pipelined multi-tile path with a ragged last tile (TS=5 over S=8 -> NT=2).
    allemb_t, _, _ = modular_prompt_forward(
        input_ids, attention_mask, target_ids,
        emb_table, prompt_fix, prompt_learn,
        pad_token_id=PAD, concat_mode="right_concat", seq_tile=5)
    jax.block_until_ready(allemb_t)
    np.testing.assert_allclose(np.asarray(allemb_t), np.asarray(ref_right),
                               rtol=1e-6, atol=1e-6)

    # 4) >= 3 tiles exercises semaphore-slot reuse across the deferred waits.
    allemb_t3, _, _ = modular_prompt_forward(
        input_ids, attention_mask, target_ids,
        emb_table, prompt_fix, prompt_learn,
        pad_token_id=PAD, concat_mode="right_concat", seq_tile=3)
    jax.block_until_ready(allemb_t3)
    np.testing.assert_allclose(np.asarray(allemb_t3), np.asarray(ref_right),
                               rtol=1e-6, atol=1e-6)

    # 5) bf16 table/prompts (gather is an exact byte copy -> exact equality).
    emb_bf16 = emb_table.astype(jnp.bfloat16)
    allemb_b, _, _ = modular_prompt_forward(
        input_ids, attention_mask, target_ids,
        emb_bf16, prompt_fix, prompt_learn,
        pad_token_id=PAD, concat_mode="right_concat")
    jax.block_until_ready(allemb_b)
    ref_b = jnp.concatenate(
        [emb_bf16[input_ids],
         jnp.broadcast_to(ref_prompt.astype(jnp.bfloat16)[None], (B, 2 * L * P, D))],
        axis=1)
    np.testing.assert_array_equal(np.asarray(allemb_b.astype(jnp.float32)),
                                  np.asarray(ref_b.astype(jnp.float32)))

    print("KERNEL_OK")
</pallas_src>

<mosaic_0001>
module attributes {stable_mosaic.version = 11 : i64} {
  func.func @_assemble_kernel(%arg0: i32, %arg1: i32, %arg2: memref<2x8xi32, #tpu.memory_space<any>>, %arg3: memref<64x32xf32, #tpu.memory_space<any>>, %arg4: memref<24x32xf32, #tpu.memory_space<vmem>>, %arg5: memref<1x32x32xf32, #tpu.memory_space<vmem>>, %arg6: memref<8xi32, #tpu.memory_space<smem>>, %arg7: memref<2x!tpu.dma_semaphore, #tpu.memory_space<semaphore_mem>>, %arg8: memref<!tpu.dma_semaphore, #tpu.memory_space<semaphore_mem>>) attributes {dimension_semantics = [#tpu.dimension_semantics<parallel>, #tpu.dimension_semantics<arbitrary>], iteration_bounds = array<i64: 2, 1>, scalar_prefetch = 0 : i64, scratch_operands = 3 : i64, tpu.core_type = #tpu.core_type<tc>, window_params = [{}, {}, {pipeline_mode = #tpu.pipeline_mode<synchronous>, transform_indices = @transform_2, window_bounds = array<i64: 24, 32>}, {transform_indices = @transform_3, window_bounds = array<i64: 1, 32, 32>}]} {
    %c2_i32 = arith.constant 2 : i32
    %0 = arith.remsi %arg1, %c2_i32 : i32
    %c0_i32 = arith.constant 0 : i32
    %1 = arith.cmpi eq, %arg1, %c0_i32 : i32
    %2 = arith.extui %1 : i1 to i32
    %c0_i32_0 = arith.constant 0 : i32
    %3 = arith.cmpi ne, %2, %c0_i32_0 : i32
    scf.if %3 {
      %c0_i32_47 = arith.constant 0 : i32
      %92 = tpu.memref_slice %arg2[%arg0, %c0_i32_47] : memref<2x8xi32, #tpu.memory_space<any>> -> memref<1x8xi32, #tpu.memory_space<any>>
      %93 = tpu.memref_squeeze %92 : memref<1x8xi32, #tpu.memory_space<any>> -> memref<8xi32, #tpu.memory_space<any>>
      tpu.enqueue_dma source(%93 : memref<8xi32, #tpu.memory_space<any>>) target(%arg6 : memref<8xi32, #tpu.memory_space<smem>>) target_semaphore(%arg8 : memref<!tpu.dma_semaphore, #tpu.memory_space<semaphore_mem>>)
      %c0 = arith.constant 0 : index
      %c0_48 = arith.constant 0 : index
      %94 = vector.load %arg4[%c0, %c0_48] : memref<24x32xf32, #tpu.memory_space<vmem>>, vector<24x32xf32>
      %c0_49 = arith.constant 0 : index
      %c8 = arith.constant 8 : index
      %c0_50 = arith.constant 0 : index
      %95 = vector.load %arg5[%c0_49, %c8, %c0_50] : memref<1x32x32xf32, #tpu.memory_space<vmem>>, vector<1x24x32xf32>
      %96 = vector.shape_cast %95 : vector<1x24x32xf32> to vector<24x32xf32>
      %97 = vector.shape_cast %94 : vector<24x32xf32> to vector<1x24x32xf32>
      tpu.vector_store %arg5[%c0_49, %c8, %c0_50], %97 {strides = array<i32>} : memref<1x32x32xf32, #tpu.memory_space<vmem>>, vector<1x24x32xf32>,
      %c0_i32_51 = arith.constant 0 : i32
      %98 = tpu.memref_slice %arg2[%arg0, %c0_i32_51] : memref<2x8xi32, #tpu.memory_space<any>> -> memref<1x8xi32, #tpu.memory_space<any>>
      %99 = tpu.memref_squeeze %98 : memref<1x8xi32, #tpu.memory_space<any>> -> memref<8xi32, #tpu.memory_space<any>>
      tpu.wait_dma2 semaphore(%arg8 : memref<!tpu.dma_semaphore, #tpu.memory_space<semaphore_mem>>) src(%99 : memref<8xi32, #tpu.memory_space<any>>) dst(%arg6 : memref<8xi32, #tpu.memory_space<smem>>)
    } else {
    }
    %c8_i32 = arith.constant 8 : i32
    %4 = arith.muli %arg1, %c8_i32 : i32
    %5 = tpu.assume_multiple %4, 8 : i32
    %c0_i32_1 = arith.constant 0 : i32
    %6 = arith.addi %5, %c0_i32_1 : i32
    %7 = arith.index_cast %6 : i32 to index
    %8 = memref.load %arg6[%7] : memref<8xi32, #tpu.memory_space<smem>>
    %c0_i32_2 = arith.constant 0 : i32
    %9 = arith.addi %c0_i32_2, %5 : i32
    %c0_i32_3 = arith.constant 0 : i32
    %10 = arith.addi %9, %c0_i32_3 : i32
    %c0_i32_4 = arith.constant 0 : i32
    %c0_i32_5 = arith.constant 0 : i32
    %11 = tpu.memref_slice %arg3[%8, %c0_i32_5] : memref<64x32xf32, #tpu.memory_space<any>> -> memref<1x32xf32, #tpu.memory_space<any>>
    %c0_i32_6 = arith.constant 0 : i32
    %12 = tpu.memref_slice %arg5[%c0_i32_4, %10, %c0_i32_6] : memref<1x32x32xf32, #tpu.memory_space<vmem>> -> memref<1x1x32xf32, #tpu.memory_space<vmem>>
    %13 = tpu.memref_squeeze %12 : memref<1x1x32xf32, #tpu.memory_space<vmem>> -> memref<1x32xf32, #tpu.memory_space<vmem>>
    %14 = tpu.memref_slice %arg7[%0] : memref<2x!tpu.dma_semaphore, #tpu.memory_space<semaphore_mem>> -> memref<1x!tpu.dma_semaphore, #tpu.memory_space<semaphore_mem>>
    %15 = tpu.memref_squeeze %14 : memref<1x!tpu.dma_semaphore, #tpu.memory_space<semaphore_mem>> -> memref<!tpu.dma_semaphore, #tpu.memory_space<semaphore_mem>>
    tpu.enqueue_dma source(%11 : memref<1x32xf32, #tpu.memory_space<any>>) target(%13 : memref<1x32xf32, #tpu.memory_space<vmem>>) target_semaphore(%15 : memref<!tpu.dma_semaphore, #tpu.memory_space<semaphore_mem>>)
    %c1_i32 = arith.constant 1 : i32
    %16 = arith.addi %5, %c1_i32 : i32
    %17 = arith.index_cast %16 : i32 to index
    %18 = memref.load %arg6[%17] : memref<8xi32, #tpu.memory_space<smem>>
    %c0_i32_7 = arith.constant 0 : i32
    %19 = arith.addi %c0_i32_7, %5 : i32
    %c1_i32_8 = arith.constant 1 : i32
    %20 = arith.addi %19, %c1_i32_8 : i32
    %c0_i32_9 = arith.constant 0 : i32
    %c0_i32_10 = arith.constant 0 : i32
    %21 = tpu.memref_slice %arg3[%18, %c0_i32_10] : memref<64x32xf32, #tpu.memory_space<any>> -> memref<1x32xf32, #tpu.memory_space<any>>
    %c0_i32_11 = arith.constant 0 : i32
    %22 = tpu.memref_slice %arg5[%c0_i32_9, %20, %c0_i32_11] : memref<1x32x32xf32, #tpu.memory_space<vmem>> -> memref<1x1x32xf32, #tpu.memory_space<vmem>>
    %23 = tpu.memref_squeeze %22 : memref<1x1x32xf32, #tpu.memory_space<vmem>> -> memref<1x32xf32, #tpu.memory_space<vmem>>
    %24 = tpu.memref_slice %arg7[%0] : memref<2x!tpu.dma_semaphore, #tpu.memory_space<semaphore_mem>> -> memref<1x!tpu.dma_semaphore, #tpu.memory_space<semaphore_mem>>
    %25 = tpu.memref_squeeze %24 : memref<1x!tpu.dma_semaphore, #tpu.memory_space<semaphore_mem>> -> memref<!tpu.dma_semaphore, #tpu.memory_space<semaphore_mem>>
    tpu.enqueue_dma source(%21 : memref<1x32xf32, #tpu.memory_space<any>>) target(%23 : memref<1x32xf32, #tpu.memory_space<vmem>>) target_semaphore(%25 : memref<!tpu.dma_semaphore, #tpu.memory_space<semaphore_mem>>)
    %c2_i32_12 = arith.constant 2 : i32
    %26 = arith.addi %5, %c2_i32_12 : i32
    %27 = arith.index_cast %26 : i32 to index
    %28 = memref.load %arg6[%27] : memref<8xi32, #tpu.memory_space<smem>>
    %c0_i32_13 = arith.constant 0 : i32
    %29 = arith.addi %c0_i32_13, %5 : i32
    %c2_i32_14 = arith.constant 2 : i32
    %30 = arith.addi %29, %c2_i32_14 : i32
    %c0_i32_15 = arith.constant 0 : i32
    %c0_i32_16 = arith.constant 0 : i32
    %31 = tpu.memref_slice %arg3[%28, %c0_i32_16] : memref<64x32xf32, #tpu.memory_space<any>> -> memref<1x32xf32, #tpu.memory_space<any>>
    %c0_i32_17 = arith.constant 0 : i32
    %32 = tpu.memref_slice %arg5[%c0_i32_15, %30, %c0_i32_17] : memref<1x32x32xf32, #tpu.memory_space<vmem>> -> memref<1x1x32xf32, #tpu.memory_space<vmem>>
    %33 = tpu.memref_squeeze %32 : memref<1x1x32xf32, #tpu.memory_space<vmem>> -> memref<1x32xf32, #tpu.memory_space<vmem>>
    %34 = tpu.memref_slice %arg7[%0] : memref<2x!tpu.dma_semaphore, #tpu.memory_space<semaphore_mem>> -> memref<1x!tpu.dma_semaphore, #tpu.memory_space<semaphore_mem>>
    %35 = tpu.memref_squeeze %34 : memref<1x!tpu.dma_semaphore, #tpu.memory_space<semaphore_mem>> -> memref<!tpu.dma_semaphore, #tpu.memory_space<semaphore_mem>>
    tpu.enqueue_dma source(%31 : memref<1x32xf32, #tpu.memory_space<any>>) target(%33 : memref<1x32xf32, #tpu.memory_space<vmem>>) target_semaphore(%35 : memref<!tpu.dma_semaphore, #tpu.memory_space<semaphore_mem>>)
    %c3_i32 = arith.constant 3 : i32
    %36 = arith.addi %5, %c3_i32 : i32
    %37 = arith.index_cast %36 : i32 to index
    %38 = memref.load %arg6[%37] : memref<8xi32, #tpu.memory_space<smem>>
    %c0_i32_18 = arith.constant 0 : i32
    %39 = arith.addi %c0_i32_18, %5 : i32
    %c3_i32_19 = arith.constant 3 : i32
    %40 = arith.addi %39, %c3_i32_19 : i32
    %c0_i32_20 = arith.constant 0 : i32
    %c0_i32_21 = arith.constant 0 : i32
    %41 = tpu.memref_slice %arg3[%38, %c0_i32_21] : memref<64x32xf32, #tpu.memory_space<any>> -> memref<1x32xf32, #tpu.memory_space<any>>
    %c0_i32_22 = arith.constant 0 : i32
    %42 = tpu.memref_slice %arg5[%c0_i32_20, %40, %c0_i32_22] : memref<1x32x32xf32, #tpu.memory_space<vmem>> -> memref<1x1x32xf32, #tpu.memory_space<vmem>>
    %43 = tpu.memref_squeeze %42 : memref<1x1x32xf32, #tpu.memory_space<vmem>> -> memref<1x32xf32, #tpu.memory_space<vmem>>
    %44 = tpu.memref_slice %arg7[%0] : memref<2x!tpu.dma_semaphore, #tpu.memory_space<semaphore_mem>> -> memref<1x!tpu.dma_semaphore, #tpu.memory_space<semaphore_mem>>
    %45 = tpu.memref_squeeze %44 : memref<1x!tpu.dma_semaphore, #tpu.memory_space<semaphore_mem>> -> memref<!tpu.dma_semaphore, #tpu.memory_space<semaphore_mem>>
    tpu.enqueue_dma source(%41 : memref<1x32xf32, #tpu.memory_space<any>>) target(%43 : memref<1x32xf32, #tpu.memory_space<vmem>>) target_semaphore(%45 : memref<!tpu.dma_semaphore, #tpu.memory_space<semaphore_mem>>)
    %c4_i32 = arith.constant 4 : i32
    %46 = arith.addi %5, %c4_i32 : i32
    %47 = arith.index_cast %46 : i32 to index
    %48 = memref.load %arg6[%47] : memref<8xi32, #tpu.memory_space<smem>>
    %c0_i32_23 = arith.constant 0 : i32
    %49 = arith.addi %c0_i32_23, %5 : i32
    %c4_i32_24 = arith.constant 4 : i32
    %50 = arith.addi %49, %c4_i32_24 : i32
    %c0_i32_25 = arith.constant 0 : i32
    %c0_i32_26 = arith.constant 0 : i32
    %51 = tpu.memref_slice %arg3[%48, %c0_i32_26] : memref<64x32xf32, #tpu.memory_space<any>> -> memref<1x32xf32, #tpu.memory_space<any>>
    %c0_i32_27 = arith.constant 0 : i32
    %52 = tpu.memref_slice %arg5[%c0_i32_25, %50, %c0_i32_27] : memref<1x32x32xf32, #tpu.memory_space<vmem>> -> memref<1x1x32xf32, #tpu.memory_space<vmem>>
    %53 = tpu.memref_squeeze %52 : memref<1x1x32xf32, #tpu.memory_space<vmem>> -> memref<1x32xf32, #tpu.memory_space<vmem>>
    %54 = tpu.memref_slice %arg7[%0] : memref<2x!tpu.dma_semaphore, #tpu.memory_space<semaphore_mem>> -> memref<1x!tpu.dma_semaphore, #tpu.memory_space<semaphore_mem>>
    %55 = tpu.memref_squeeze %54 : memref<1x!tpu.dma_semaphore, #tpu.memory_space<semaphore_mem>> -> memref<!tpu.dma_semaphore, #tpu.memory_space<semaphore_mem>>
    tpu.enqueue_dma source(%51 : memref<1x32xf32, #tpu.memory_space<any>>) target(%53 : memref<1x32xf32, #tpu.memory_space<vmem>>) target_semaphore(%55 : memref<!tpu.dma_semaphore, #tpu.memory_space<semaphore_mem>>)
    %c5_i32 = arith.constant 5 : i32
    %56 = arith.addi %5, %c5_i32 : i32
    %57 = arith.index_cast %56 : i32 to index
    %58 = memref.load %arg6[%57] : memref<8xi32, #tpu.memory_space<smem>>
    %c0_i32_28 = arith.constant 0 : i32
    %59 = arith.addi %c0_i32_28, %5 : i32
    %c5_i32_29 = arith.constant 5 : i32
    %60 = arith.addi %59, %c5_i32_29 : i32
    %c0_i32_30 = arith.constant 0 : i32
    %c0_i32_31 = arith.constant 0 : i32
    %61 = tpu.memref_slice %arg3[%58, %c0_i32_31] : memref<64x32xf32, #tpu.memory_space<any>> -> memref<1x32xf32, #tpu.memory_space<any>>
    %c0_i32_32 = arith.constant 0 : i32
    %62 = tpu.memref_slice %arg5[%c0_i32_30, %60, %c0_i32_32] : memref<1x32x32xf32, #tpu.memory_space<vmem>> -> memref<1x1x32xf32, #tpu.memory_space<vmem>>
    %63 = tpu.memref_squeeze %62 : memref<1x1x32xf32, #tpu.memory_space<vmem>> -> memref<1x32xf32, #tpu.memory_space<vmem>>
    %64 = tpu.memref_slice %arg7[%0] : memref<2x!tpu.dma_semaphore, #tpu.memory_space<semaphore_mem>> -> memref<1x!tpu.dma_semaphore, #tpu.memory_space<semaphore_mem>>
    %65 = tpu.memref_squeeze %64 : memref<1x!tpu.dma_semaphore, #tpu.memory_space<semaphore_mem>> -> memref<!tpu.dma_semaphore, #tpu.memory_space<semaphore_mem>>
    tpu.enqueue_dma source(%61 : memref<1x32xf32, #tpu.memory_space<any>>) target(%63 : memref<1x32xf32, #tpu.memory_space<vmem>>) target_semaphore(%65 : memref<!tpu.dma_semaphore, #tpu.memory_space<semaphore_mem>>)
    %c6_i32 = arith.constant 6 : i32
    %66 = arith.addi %5, %c6_i32 : i32
    %67 = arith.index_cast %66 : i32 to index
    %68 = memref.load %arg6[%67] : memref<8xi32, #tpu.memory_space<smem>>
    %c0_i32_33 = arith.constant 0 : i32
    %69 = arith.addi %c0_i32_33, %5 : i32
    %c6_i32_34 = arith.constant 6 : i32
    %70 = arith.addi %69, %c6_i32_34 : i32
    %c0_i32_35 = arith.constant 0 : i32
    %c0_i32_36 = arith.constant 0 : i32
    %71 = tpu.memref_slice %arg3[%68, %c0_i32_36] : memref<64x32xf32, #tpu.memory_space<any>> -> memref<1x32xf32, #tpu.memory_space<any>>
    %c0_i32_37 = arith.constant 0 : i32
    %72 = tpu.memref_slice %arg5[%c0_i32_35, %70, %c0_i32_37] : memref<1x32x32xf32, #tpu.memory_space<vmem>> -> memref<1x1x32xf32, #tpu.memory_space<vmem>>
    %73 = tpu.memref_squeeze %72 : memref<1x1x32xf32, #tpu.memory_space<vmem>> -> memref<1x32xf32, #tpu.memory_space<vmem>>
    %74 = tpu.memref_slice %arg7[%0] : memref<2x!tpu.dma_semaphore, #tpu.memory_space<semaphore_mem>> -> memref<1x!tpu.dma_semaphore, #tpu.memory_space<semaphore_mem>>
    %75 = tpu.memref_squeeze %74 : memref<1x!tpu.dma_semaphore, #tpu.memory_space<semaphore_mem>> -> memref<!tpu.dma_semaphore, #tpu.memory_space<semaphore_mem>>
    tpu.enqueue_dma source(%71 : memref<1x32xf32, #tpu.memory_space<any>>) target(%73 : memref<1x32xf32, #tpu.memory_space<vmem>>) target_semaphore(%75 : memref<!tpu.dma_semaphore, #tpu.memory_space<semaphore_mem>>)
    %c7_i32 = arith.constant 7 : i32
    %76 = arith.addi %5, %c7_i32 : i32
    %77 = arith.index_cast %76 : i32 to index
    %78 = memref.load %arg6[%77] : memref<8xi32, #tpu.memory_space<smem>>
    %c0_i32_38 = arith.constant 0 : i32
    %79 = arith.addi %c0_i32_38, %5 : i32
    %c7_i32_39 = arith.constant 7 : i32
    %80 = arith.addi %79, %c7_i32_39 : i32
    %c0_i32_40 = arith.constant 0 : i32
    %c0_i32_41 = arith.constant 0 : i32
    %81 = tpu.memref_slice %arg3[%78, %c0_i32_41] : memref<64x32xf32, #tpu.memory_space<any>> -> memref<1x32xf32, #tpu.memory_space<any>>
    %c0_i32_42 = arith.constant 0 : i32
    %82 = tpu.memref_slice %arg5[%c0_i32_40, %80, %c0_i32_42] : memref<1x32x32xf32, #tpu.memory_space<vmem>> -> memref<1x1x32xf32, #tpu.memory_space<vmem>>
    %83 = tpu.memref_squeeze %82 : memref<1x1x32xf32, #tpu.memory_space<vmem>> -> memref<1x32xf32, #tpu.memory_space<vmem>>
    %84 = tpu.memref_slice %arg7[%0] : memref<2x!tpu.dma_semaphore, #tpu.memory_space<semaphore_mem>> -> memref<1x!tpu.dma_semaphore, #tpu.memory_space<semaphore_mem>>
    %85 = tpu.memref_squeeze %84 : memref<1x!tpu.dma_semaphore, #tpu.memory_space<semaphore_mem>> -> memref<!tpu.dma_semaphore, #tpu.memory_space<semaphore_mem>>
    tpu.enqueue_dma source(%81 : memref<1x32xf32, #tpu.memory_space<any>>) target(%83 : memref<1x32xf32, #tpu.memory_space<vmem>>) target_semaphore(%85 : memref<!tpu.dma_semaphore, #tpu.memory_space<semaphore_mem>>)
    %c0_i32_43 = arith.constant 0 : i32
    %86 = arith.cmpi sgt, %arg1, %c0_i32_43 : i32
    %87 = arith.extui %86 : i1 to i32
    %c0_i32_44 = arith.constant 0 : i32
    %88 = arith.cmpi ne, %87, %c0_i32_44 : i32
    scf.if %88 {
      %c1_i32_47 = arith.constant 1 : i32
      %92 = arith.subi %arg1, %c1_i32_47 : i32
      %c8_i32_48 = arith.constant 8 : i32
      %93 = arith.muli %92, %c8_i32_48 : i32
      %c0_i32_49 = arith.constant 0 : i32
      %94 = arith.addi %c0_i32_49, %93 : i32
      %c1_i32_50 = arith.constant 1 : i32
      %95 = arith.subi %c1_i32_50, %0 : i32
      %c0_i32_51 = arith.constant 0 : i32
      %c0_i32_52 = arith.constant 0 : i32
      %c0_i32_53 = arith.constant 0 : i32
      %96 = tpu.memref_slice %arg3[%c0_i32_52, %c0_i32_53] : memref<64x32xf32, #tpu.memory_space<any>> -> memref<8x32xf32, #tpu.memory_space<any>>
      %c0_i32_54 = arith.constant 0 : i32
      %97 = tpu.memref_slice %arg5[%c0_i32_51, %94, %c0_i32_54] : memref<1x32x32xf32, #tpu.memory_space<vmem>> -> memref<1x8x32xf32, #tpu.memory_space<vmem>>
      %98 = tpu.memref_squeeze %97 : memref<1x8x32xf32, #tpu.memory_space<vmem>> -> memref<8x32xf32, #tpu.memory_space<vmem>>
      %99 = tpu.memref_slice %arg7[%95] : memref<2x!tpu.dma_semaphore, #tpu.memory_space<semaphore_mem>> -> memref<1x!tpu.dma_semaphore, #tpu.memory_space<semaphore_mem>>
      %100 = tpu.memref_squeeze %99 : memref<1x!tpu.dma_semaphore, #tpu.memory_space<semaphore_mem>> -> memref<!tpu.dma_semaphore, #tpu.memory_space<semaphore_mem>>
      tpu.wait_dma2 semaphore(%100 : memref<!tpu.dma_semaphore, #tpu.memory_space<semaphore_mem>>) src(%96 : memref<8x32xf32, #tpu.memory_space<any>>) dst(%98 : memref<8x32xf32, #tpu.memory_space<vmem>>)
    } else {
    }
    %c0_i32_45 = arith.constant 0 : i32
    %89 = arith.cmpi eq, %arg1, %c0_i32_45 : i32
    %90 = arith.extui %89 : i1 to i32
    %c0_i32_46 = arith.constant 0 : i32
    %91 = arith.cmpi ne, %90, %c0_i32_46 : i32
    scf.if %91 {
      %c0_i32_47 = arith.constant 0 : i32
      %c0_i32_48 = arith.constant 0 : i32
      %c0_i32_49 = arith.constant 0 : i32
      %92 = tpu.memref_slice %arg3[%c0_i32_48, %c0_i32_49] : memref<64x32xf32, #tpu.memory_space<any>> -> memref<8x32xf32, #tpu.memory_space<any>>
      %c0_i32_50 = arith.constant 0 : i32
      %c0_i32_51 = arith.constant 0 : i32
      %93 = tpu.memref_slice %arg5[%c0_i32_47, %c0_i32_50, %c0_i32_51] : memref<1x32x32xf32, #tpu.memory_space<vmem>> -> memref<1x8x32xf32, #tpu.memory_space<vmem>>
      %94 = tpu.memref_squeeze %93 : memref<1x8x32xf32, #tpu.memory_space<vmem>> -> memref<8x32xf32, #tpu.memory_space<vmem>>
      %95 = tpu.memref_slice %arg7[%0] : memref<2x!tpu.dma_semaphore, #tpu.memory_space<semaphore_mem>> -> memref<1x!tpu.dma_semaphore, #tpu.memory_space<semaphore_mem>>
      %96 = tpu.memref_squeeze %95 : memref<1x!tpu.dma_semaphore, #tpu.memory_space<semaphore_mem>> -> memref<!tpu.dma_semaphore, #tpu.memory_space<semaphore_mem>>
      tpu.wait_dma2 semaphore(%96 : memref<!tpu.dma_semaphore, #tpu.memory_space<semaphore_mem>>) src(%92 : memref<8x32xf32, #tpu.memory_space<any>>) dst(%94 : memref<8x32xf32, #tpu.memory_space<vmem>>)
    } else {
    }
    return
  }
  func.func @transform_2(%arg0: i32, %arg1: i32) -> (i32, i32) {
    %c0_i32 = arith.constant 0 : i32
    %c0_i32_0 = arith.constant 0 : i32
    %c0_i32_1 = arith.constant 0 : i32
    return %c0_i32, %c0_i32_0 : i32, i32
  }
  func.func @transform_3(%arg0: i32, %arg1: i32) -> (i32, i32, i32) {
    %c0_i32 = arith.constant 0 : i32
    %c0_i32_0 = arith.constant 0 : i32
    %c0_i32_1 = arith.constant 0 : i32
    return %arg0, %c0_i32, %c0_i32_0 : i32, i32, i32
  }
}

</mosaic_0001>

<llo_original>
// kernel: tpu_custom_call.1
$region0: #{tpu_custom_call.1}
  #allocation0 [shape = 'u32[]', space=smem, size = 0x4, offset = 0x4, fixed_abs, tag = 'smem constant byte address 0x4 - core index']
  #allocation1 [shape = 'u32[144,128]{1,0:T(1,128)}', space=vmem, size = 0x12000, scoped, tag = 'internal scratch']
  #allocation2 [shape = 's32[8]{0:T(128)}', space=smem, size = 0x200, scoped, tag = 'scratch operand']
  #allocation3 [shape = 's32[2]{0}', space=sflag, size = 0x8, scoped, tag = 'scratch operand']
  #allocation4 [shape = 's32[1]{0}', space=sflag, size = 0x4, scoped, tag = 'scratch operand']
  #allocation7 [shape = 's32[]', space=sflag, size = 0x4, offset = 0, fixed_abs, tag = 'sflag constant byte address 0x0 - dummy sync flag']
  #allocation8 [shape = 's32[]', space=sflag, size = 0x4, offset = 0, fixed_abs, tag = 'sflag constant byte address 0x0 - dummy sync flag']
  #allocation9 [shape = 'u32[]', space=smem, size = 0x4, offset = 0x44, fixed_abs, tag = 'smem constant byte address 0x44 - assertion arg 0']
  #allocation10 [shape = 'u32[]', space=smem, size = 0x4, offset = 0x48, fixed_abs, tag = 'smem constant byte address 0x48 - assertion arg 1']
  #allocation11 [shape = 's32[]', space=sflag, size = 0x4, offset = 0, fixed_abs, tag = 'sflag constant byte address 0x0 - dummy sync flag']
  #allocation12 [shape = 's32[]', space=sflag, size = 0x4, offset = 0, fixed_abs, tag = 'sflag constant byte address 0x0 - dummy sync flag']
  #allocation13 [shape = 's32[]', space=sflag, size = 0x4, offset = 0, fixed_abs, tag = 'sflag constant byte address 0x0 - dummy sync flag']
  #allocation14 [shape = 's32[]', space=sflag, size = 0x4, offset = 0, fixed_abs, tag = 'sflag constant byte address 0x0 - dummy sync flag']
  #allocation15 [shape = 's32[]', space=sflag, size = 0x4, offset = 0, fixed_abs, tag = 'sflag constant byte address 0x0 - dummy sync flag']
  #allocation16 [shape = 's32[]', space=sflag, size = 0x4, offset = 0, fixed_abs, tag = 'sflag constant byte address 0x0 - dummy sync flag']
  #allocation17 [shape = 's32[]', space=sflag, size = 0x4, offset = 0, fixed_abs, tag = 'sflag constant byte address 0x0 - dummy sync flag']
  #allocation18 [shape = 's32[]', space=sflag, size = 0x4, offset = 0, fixed_abs, tag = 'sflag constant byte address 0x0 - dummy sync flag']
  %s0 = inlined_call_operand.vmem [shape: s32[2,8], index: 0, kind: input, shape index: {}]
  %s1 = inlined_call_operand.vmem [shape: f32[64,32], index: 1, kind: input, shape index: {}]
  %s2 = inlined_call_operand.vmem [shape: f32[24,32], index: 2, kind: input, shape index: {}]
  %s3 = inlined_call_operand.hbm [shape: f32[2,32,32], index: 3, kind: output, shape index: {}]
  %s4 = sld [smem:[#allocation0]]
  $region293: #{tpu_custom_call.1} parent=0
    _
  %s6 = ssub.s32 1, %s4
  %s7 = scalar_select 0, %s6, %s4
  $region1: #{tpu_custom_call.1} parent=0
    #allocation5 [shape = 'u8[32768]{0}', space=vmem, size = 0x8000, scoped, tag = 'output window, operand 0']
    #allocation6 [shape = 's32[2]{0}', space=sflag, size = 0x8, scoped, tag = 'scoped memory for tpu_custom_call.1']
    %8 = vsyncpa [#allocation6], 0
    %s9 = scalar_lea.sflag [#allocation6], 1
    %10 = vsyncpa %s9, 0
    loop: start=0, step=1, limit=4
    $region2: #{tpu_custom_call.1} parent=1 // loop_pre_header
      _
    $region3: #{tpu_custom_call.1} parent=1 // loop_header
      %s12 = sphi 0, %s16
      %p13 = scmp.ge.s32.totalorder %s12, 4
      %s19 = sphi 0, %s31
      %s20 = sphi 0, %s27
      %s21 = sphi 0, %s19
      %s22 = sphi 0, %s20
      %s23 = sphi 0, %s21
      %s24 = sphi 0, %s22
      %s32 = sphi 0, %s32
      %s34 = sphi 0, %s32
      %s35 = sphi 0, %s34
      %s49 = sphi 0, %s35
      %s55 = sphi 0, %s57
      %s58 = sphi 0, %s55
      %s59 = sphi 0, %s58
      %s75 = sphi 0, %s59
    $region4: #{tpu_custom_call.1} parent=1 // loop_header_branch
      %15 = sbr.rel (%p13) target = $region8
    $region5: #{tpu_custom_call.1} parent=1 // loop_body
      %s17 = ssub.s32 %s12, 1
      %s18 = ssub.s32 %s12, 2
      %s25 = sadd.s32 1, %s20
      %p26 = scmp.ge.s32.totalorder %s25, 1
      %s27 = scalar_select %p26, 0, %s25
      %s28 = sadd.s32 1, %s19
      %s29 = scalar_select %p26, %s28, %s19
      %p30 = scmp.ge.s32.totalorder %s29, 2
      %s31 = scalar_select %p30, 0, %s29
      %s33 = sadd.s32 %s32, 1
      %p36 = scmp.eq.s32.totalorder %s12, 1
      %p37 = scmp.ne.s32.totalorder %s32, %s34
      %p38 = scmp.eq.s32.totalorder %s12, 0
      %p39 = por %p37, %p38
      %p40 = scmp.ne.s32.totalorder %s32, %s34
      %p41 = scmp.eq.s32.totalorder %s17, 1
      %p42 = por %p40, %p41
      %p43 = scmp.ne.s32.totalorder %s34, %s35
      %p44 = scmp.eq.s32.totalorder %s17, 0
      %p45 = por %p43, %p44
      %p46 = scmp.ne.s32.totalorder %s34, %s35
      %p47 = scmp.eq.s32.totalorder %s18, 1
      %p48 = por %p46, %p47
      %p50 = scmp.ne.s32.totalorder %s35, %s49
      %p51 = scmp.eq.s32.totalorder %s18, 0
      %p52 = por %p50, %p51
      %s53 = ssub.s32 %s19, %s31
      %p54 = scmp.eq.s32.totalorder %s53, 0
      %s56 = sadd.s32 %s55, 1
      %s57 = scalar_select %p54, %s55, %s56
      %p60 = pneg %p54
      %p61 = scmp.eq.s32.totalorder %s12, 1
      %p62 = por %p60, %p61
      %p63 = scmp.ne.s32.totalorder %s55, %s58
      %p64 = scmp.eq.s32.totalorder %s12, 0
      %p65 = por %p63, %p64
      %p66 = scmp.ne.s32.totalorder %s55, %s58
      %p67 = scmp.eq.s32.totalorder %s17, 1
      %p68 = por %p66, %p67
      %p69 = scmp.ne.s32.totalorder %s58, %s59
      %p70 = scmp.eq.s32.totalorder %s17, 0
      %p71 = por %p69, %p70
      %p72 = scmp.ne.s32.totalorder %s58, %s59
      %p73 = scmp.eq.s32.totalorder %s18, 1
      %p74 = por %p72, %p73
      %p76 = scmp.ne.s32.totalorder %s59, %s75
      %p77 = scmp.eq.s32.totalorder %s18, 0
      %p78 = por %p76, %p77
      %p79 = scmp.le.s32.totalorder 1, %s12
      %p80 = scmp.lt.s32.totalorder %s12, 3
      %p81 = pnand %p79, %p80
      %p82 = pneg %p81
      // Predicated region
      $region9: #{tpu_custom_call.1} parent=5 // pred_check
        _
      $region10: #{tpu_custom_call.1} parent=5 // pred_check_branch
        %84 = sbr.rel (%p81) target = $region12
      $region11: #{tpu_custom_call.1} parent=5 // pred_region
        %s85 = ssub.s32 %s12, 1
        // Predicated region
        $region13: #{tpu_custom_call.1} parent=11 // pred_check
          %p86 = pneg %p45
        $region14: #{tpu_custom_call.1} parent=11 // pred_check_branch
          %88 = sbr.rel (%p86) target = $region16
        $region15: #{tpu_custom_call.1} parent=11 // pred_region
          _
        $region16: #{tpu_custom_call.1} parent=11 // pred_fallthru
          _
      $region12: #{tpu_custom_call.1} parent=5 // pred_fallthru
        _
      %p89 = scmp.lt.s32.totalorder %s12, 2
      // Predicated region
      $region17: #{tpu_custom_call.1} parent=5 // pred_check
        %p90 = pneg %p89
      $region18: #{tpu_custom_call.1} parent=5 // pred_check_branch
        %92 = sbr.rel (%p90) target = $region20
      $region19: #{tpu_custom_call.1} parent=5 // pred_region
        _
      $region20: #{tpu_custom_call.1} parent=5 // pred_fallthru
        _
      %p93 = scmp.le.s32.totalorder 1, %s12
      %p94 = scmp.lt.s32.totalorder %s12, 3
      %p95 = pnand %p93, %p94
      %p96 = pneg %p95
      // Predicated region
      $region21: #{tpu_custom_call.1} parent=5 // pred_check
        _
      $region22: #{tpu_custom_call.1} parent=5 // pred_check_branch
        %98 = sbr.rel (%p95) target = $region24
      $region23: #{tpu_custom_call.1} parent=5 // pred_region
        %s99 = ssub.s32 %s12, 1
        %p100 = pneg %p45
        %p101 = pneg %p42
        %p102 = pneg %p71
        %p103 = pneg %p68
        %s104 = sand.u32 %s58, 1
        %s105 = scalar_lea.sflag [#allocation6], %s104
        %s106 = sand.u32 %s58, 1
        %s107 = smul.addr %s106, 32
        %s108 = scalar_lea.vmem [#allocation5], %s107
        %p109 = scmp.lt.s32.totalorder %s22, 0
        %s110 = ssub.s32 0, %s22
        %s111 = scalar_select %p109, %s110, %s22
        %s112 = sand.u32 %s111, 1
        %s113 = ssub.s32 0, %s112
        %s114 = scalar_select %p109, %s113, %s112
        %p115 = scmp.eq.s32.totalorder %s22, 0
        // Predicated region
        $region25: #{tpu_custom_call.1} parent=23 // pred_check
          %p116 = pneg %p115
        $region26: #{tpu_custom_call.1} parent=23 // pred_check_branch
          %118 = sbr.rel (%p116) target = $region28
        $region27: #{tpu_custom_call.1} parent=23 // pred_region
          %s119 = scalar_lea.vmem %s0, %s21
          // Predicated region
          $region29: #{tpu_custom_call.1} parent=27 // pred_check
            _
          $region30: #{tpu_custom_call.1} parent=27 // pred_check_branch
            %121 = sbr.rel target = $region32
          $region31: #{tpu_custom_call.1} parent=27 // pred_region
            %122 = sst [smem:[#allocation9]] [#allocation8]
            %123 = sst [smem:[#allocation10]] [#allocation7]
          $region32: #{tpu_custom_call.1} parent=27 // pred_fallthru
            _
          %125 = shalt.err (0)
          %s127 = sshll.u32 %s119, 4
          %s128 = int_to_ptr.vmem [resolvable:$true] %s127
          %130 = dma.vmem_to_smem %s128, 16, [#allocation2], [#allocation4]
          %v131 = vld [vmem:[%s2] sm:$0xff]
          %v132 = vld [vmem:[%s2 + $0x8] sm:$0xff]
          %v133 = vld [vmem:[%s2 + $0x10] sm:$0xff]
          %vm134 = vcmask 261120
          %135 = vst.msk [vmem:[%s108 + $0x8] sm:$0xff] %vm134, %v131
          %136 = vst.msk [vmem:[%s108 + $0x10] sm:$0xff] %vm134, %v132
          %137 = vst.msk [vmem:[%s108 + $0x18] sm:$0xff] %vm134, %v133
          %139 = dma.done [#allocation4], 16
          %140 = sfence
        $region28: #{tpu_custom_call.1} parent=23 // pred_fallthru
          _
        %s141 = smul.u32 %s22, 8
        %s142 = sld [smem:[#allocation2 + %s141]]
        %s143 = scalar_lea.vmem %s1, %s142
        %s144 = scalar_lea.vmem %s108, %s141 [#allocation5]
        %s145 = scalar_lea.sflag [#allocation3], %s114
        %p147 = scmp.lt.u32.totalorder 1, 8
        %p148 = pneg %p147
        // Predicated region
        $region33: #{tpu_custom_call.1} parent=23 // pred_check
          _
        $region34: #{tpu_custom_call.1} parent=23 // pred_check_branch
          %150 = sbr.rel (%p147) target = $region36
        $region35: #{tpu_custom_call.1} parent=23 // pred_region
          %s165 = sand.u32 1, 7
          %p166 = scmp.eq.s32.totalorder %s165, 0
          %p167 = pneg %p166
          // Predicated region
          $region48: #{tpu_custom_call.1} parent=35 // pred_check
            _
          $region49: #{tpu_custom_call.1} parent=35 // pred_check_branch
            %169 = sbr.rel (%p166) target = $region51
          $region50: #{tpu_custom_call.1} parent=35 // pred_region
            %s170 = sand.u32 1, 7
            %s171 = ssub.s32 1, %s170
            %s172 = scalar_lea.vmem %s143, %s171
            %s173 = ssub.s32 1, %s170
            %s174 = scalar_lea.vmem %s144, %s173 [#allocation5]
            %s175 = sshllo.u32 0, %s170
            loop: start=0, step=1, limit=1
            $region52: #{tpu_custom_call.1} parent=50 // loop_pre_header
              _
            $region53: #{tpu_custom_call.1} parent=50 // loop_header
              %s177 = sphi 0, %s181
              %p178 = scmp.ge.s32.totalorder %s177, 1
              %s182 = sphi %s172, %s172
              %s183 = sphi %s174, %s174
            $region54: #{tpu_custom_call.1} parent=50 // loop_header_branch
              %180 = sbr.rel (%p178) target = $region58
            $region55: #{tpu_custom_call.1} parent=50 // loop_body
              %v184 = vld [vmem:[%s182] sm:%s175]
              %185 = vst [vmem:[%s183] sm:%s175] %v184
            $region56: #{tpu_custom_call.1} parent=50 // loop_footer
              %s181 = sadd.s32 1, %s177
            $region57: #{tpu_custom_call.1} parent=50 // loop_footer_branch
              %176 = sbr.rel target = $region53
            $region58: #{tpu_custom_call.1} parent=50 // loop_exit
              _
          $region51: #{tpu_custom_call.1} parent=35 // pred_fallthru
            _
        $region36: #{tpu_custom_call.1} parent=23 // pred_fallthru
          _
        // Predicated region
        $region37: #{tpu_custom_call.1} parent=23 // pred_check
          %p151 = pneg %p147
        $region38: #{tpu_custom_call.1} parent=23 // pred_check_branch
          %153 = sbr.rel (%p151) target = $region40
        $region39: #{tpu_custom_call.1} parent=23 // pred_region
          %s154 = sshllo.u32 0, 1
          loop: start=0, step=1, limit=1
          $region41: #{tpu_custom_call.1} parent=39 // loop_pre_header
            _
          $region42: #{tpu_custom_call.1} parent=39 // loop_header
            %s156 = sphi 0, %s160
            %p157 = scmp.ge.s32.totalorder %s156, 1
            %s161 = sphi %s143, %s143
            %s162 = sphi %s144, %s144
          $region43: #{tpu_custom_call.1} parent=39 // loop_header_branch
            %159 = sbr.rel (%p157) target = $region47
          $region44: #{tpu_custom_call.1} parent=39 // loop_body
            %v163 = vld [vmem:[%s161] sm:%s154]
            %164 = vst [vmem:[%s162] sm:%s154] %v163
          $region45: #{tpu_custom_call.1} parent=39 // loop_footer
            %s160 = sadd.s32 1, %s156
          $region46: #{tpu_custom_call.1} parent=39 // loop_footer_branch
            %155 = sbr.rel target = $region42
          $region47: #{tpu_custom_call.1} parent=39 // loop_exit
            _
        $region40: #{tpu_custom_call.1} parent=23 // pred_fallthru
          _
        // Predicated region
        $region59: #{tpu_custom_call.1} parent=23 // pred_check
          _
        $region60: #{tpu_custom_call.1} parent=23 // pred_check_branch
          %188 = sbr.rel (0) target = $region62
        $region61: #{tpu_custom_call.1} parent=23 // pred_region
          %189 = vsyncadd %s145, 16
        $region62: #{tpu_custom_call.1} parent=23 // pred_fallthru
          _
        %s190 = sadd.s32 %s141, 1
        %s191 = sld [smem:[#allocation2 + %s190]]
        %s192 = scalar_lea.vmem %s1, %s191
        %s193 = scalar_lea.vmem %s108, %s190 [#allocation5]
        %p195 = scmp.lt.u32.totalorder 1, 8
        %p196 = pneg %p195
        // Predicated region
        $region63: #{tpu_custom_call.1} parent=23 // pred_check
          _
        $region64: #{tpu_custom_call.1} parent=23 // pred_check_branch
          %198 = sbr.rel (%p195) target = $region66
        $region65: #{tpu_custom_call.1} parent=23 // pred_region
          %s213 = sand.u32 1, 7
          %p214 = scmp.eq.s32.totalorder %s213, 0
          %p215 = pneg %p214
          // Predicated region
          $region78: #{tpu_custom_call.1} parent=65 // pred_check
            _
          $region79: #{tpu_custom_call.1} parent=65 // pred_check_branch
            %217 = sbr.rel (%p214) target = $region81
          $region80: #{tpu_custom_call.1} parent=65 // pred_region
            %s218 = sand.u32 1, 7
            %s219 = ssub.s32 1, %s218
            %s220 = scalar_lea.vmem %s192, %s219
            %s221 = ssub.s32 1, %s218
            %s222 = scalar_lea.vmem %s193, %s221 [#allocation5]
            %s223 = sshllo.u32 0, %s218
            loop: start=0, step=1, limit=1
            $region82: #{tpu_custom_call.1} parent=80 // loop_pre_header
              _
            $region83: #{tpu_custom_call.1} parent=80 // loop_header
              %s225 = sphi 0, %s229
              %p226 = scmp.ge.s32.totalorder %s225, 1
              %s230 = sphi %s220, %s220
              %s231 = sphi %s222, %s222
            $region84: #{tpu_custom_call.1} parent=80 // loop_header_branch
              %228 = sbr.rel (%p226) target = $region88
            $region85: #{tpu_custom_call.1} parent=80 // loop_body
              %v232 = vld [vmem:[%s230] sm:%s223]
              %233 = vst [vmem:[%s231] sm:%s223] %v232
            $region86: #{tpu_custom_call.1} parent=80 // loop_footer
              %s229 = sadd.s32 1, %s225
            $region87: #{tpu_custom_call.1} parent=80 // loop_footer_branch
              %224 = sbr.rel target = $region83
            $region88: #{tpu_custom_call.1} parent=80 // loop_exit
              _
          $region81: #{tpu_custom_call.1} parent=65 // pred_fallthru
            _
        $region66: #{tpu_custom_call.1} parent=23 // pred_fallthru
          _
        // Predicated region
        $region67: #{tpu_custom_call.1} parent=23 // pred_check
          %p199 = pneg %p195
        $region68: #{tpu_custom_call.1} parent=23 // pred_check_branch
          %201 = sbr.rel (%p199) target = $region70
        $region69: #{tpu_custom_call.1} parent=23 // pred_region
          %s202 = sshllo.u32 0, 1
          loop: start=0, step=1, limit=1
          $region71: #{tpu_custom_call.1} parent=69 // loop_pre_header
            _
          $region72: #{tpu_custom_call.1} parent=69 // loop_header
            %s204 = sphi 0, %s208
            %p205 = scmp.ge.s32.totalorder %s204, 1
            %s209 = sphi %s192, %s192
            %s210 = sphi %s193, %s193
          $region73: #{tpu_custom_call.1} parent=69 // loop_header_branch
            %207 = sbr.rel (%p205) target = $region77
          $region74: #{tpu_custom_call.1} parent=69 // loop_body
            %v211 = vld [vmem:[%s209] sm:%s202]
            %212 = vst [vmem:[%s210] sm:%s202] %v211
          $region75: #{tpu_custom_call.1} parent=69 // loop_footer
            %s208 = sadd.s32 1, %s204
          $region76: #{tpu_custom_call.1} parent=69 // loop_footer_branch
            %203 = sbr.rel target = $region72
          $region77: #{tpu_custom_call.1} parent=69 // loop_exit
            _
        $region70: #{tpu_custom_call.1} parent=23 // pred_fallthru
          _
        // Predicated region
        $region89: #{tpu_custom_call.1} parent=23 // pred_check
          _
        $region90: #{tpu_custom_call.1} parent=23 // pred_check_branch
          %236 = sbr.rel (0) target = $region92
        $region91: #{tpu_custom_call.1} parent=23 // pred_region
          %237 = vsyncadd %s145, 16
        $region92: #{tpu_custom_call.1} parent=23 // pred_fallthru
          _
        %s238 = sadd.s32 %s141, 2
        %s239 = sld [smem:[#allocation2 + %s238]]
        %s240 = scalar_lea.vmem %s1, %s239
        %s241 = scalar_lea.vmem %s108, %s238 [#allocation5]
        %p243 = scmp.lt.u32.totalorder 1, 8
        %p244 = pneg %p243
        // Predicated region
        $region93: #{tpu_custom_call.1} parent=23 // pred_check
          _
        $region94: #{tpu_custom_call.1} parent=23 // pred_check_branch
          %246 = sbr.rel (%p243) target = $region96
        $region95: #{tpu_custom_call.1} parent=23 // pred_region
          %s261 = sand.u32 1, 7
          %p262 = scmp.eq.s32.totalorder %s261, 0
          %p263 = pneg %p262
          // Predicated region
          $region108: #{tpu_custom_call.1} parent=95 // pred_check
            _
          $region109: #{tpu_custom_call.1} parent=95 // pred_check_branch
            %265 = sbr.rel (%p262) target = $region111
          $region110: #{tpu_custom_call.1} parent=95 // pred_region
            %s266 = sand.u32 1, 7
            %s267 = ssub.s32 1, %s266
            %s268 = scalar_lea.vmem %s240, %s267
            %s269 = ssub.s32 1, %s266
            %s270 = scalar_lea.vmem %s241, %s269 [#allocation5]
            %s271 = sshllo.u32 0, %s266
            loop: start=0, step=1, limit=1
            $region112: #{tpu_custom_call.1} parent=110 // loop_pre_header
              _
            $region113: #{tpu_custom_call.1} parent=110 // loop_header
              %s273 = sphi 0, %s277
              %p274 = scmp.ge.s32.totalorder %s273, 1
              %s278 = sphi %s268, %s268
              %s279 = sphi %s270, %s270
            $region114: #{tpu_custom_call.1} parent=110 // loop_header_branch
              %276 = sbr.rel (%p274) target = $region118
            $region115: #{tpu_custom_call.1} parent=110 // loop_body
              %v280 = vld [vmem:[%s278] sm:%s271]
              %281 = vst [vmem:[%s279] sm:%s271] %v280
            $region116: #{tpu_custom_call.1} parent=110 // loop_footer
              %s277 = sadd.s32 1, %s273
            $region117: #{tpu_custom_call.1} parent=110 // loop_footer_branch
              %272 = sbr.rel target = $region113
            $region118: #{tpu_custom_call.1} parent=110 // loop_exit
              _
          $region111: #{tpu_custom_call.1} parent=95 // pred_fallthru
            _
        $region96: #{tpu_custom_call.1} parent=23 // pred_fallthru
          _
        // Predicated region
        $region97: #{tpu_custom_call.1} parent=23 // pred_check
          %p247 = pneg %p243
        $region98: #{tpu_custom_call.1} parent=23 // pred_check_branch
          %249 = sbr.rel (%p247) target = $region100
        $region99: #{tpu_custom_call.1} parent=23 // pred_region
          %s250 = sshllo.u32 0, 1
          loop: start=0, step=1, limit=1
          $region101: #{tpu_custom_call.1} parent=99 // loop_pre_header
            _
          $region102: #{tpu_custom_call.1} parent=99 // loop_header
            %s252 = sphi 0, %s256
            %p253 = scmp.ge.s32.totalorder %s252, 1
            %s257 = sphi %s240, %s240
            %s258 = sphi %s241, %s241
          $region103: #{tpu_custom_call.1} parent=99 // loop_header_branch
            %255 = sbr.rel (%p253) target = $region107
          $region104: #{tpu_custom_call.1} parent=99 // loop_body
            %v259 = vld [vmem:[%s257] sm:%s250]
            %260 = vst [vmem:[%s258] sm:%s250] %v259
          $region105: #{tpu_custom_call.1} parent=99 // loop_footer
            %s256 = sadd.s32 1, %s252
          $region106: #{tpu_custom_call.1} parent=99 // loop_footer_branch
            %251 = sbr.rel target = $region102
          $region107: #{tpu_custom_call.1} parent=99 // loop_exit
            _
        $region100: #{tpu_custom_call.1} parent=23 // pred_fallthru
          _
        // Predicated region
        $region119: #{tpu_custom_call.1} parent=23 // pred_check
          _
        $region120: #{tpu_custom_call.1} parent=23 // pred_check_branch
          %284 = sbr.rel (0) target = $region122
        $region121: #{tpu_custom_call.1} parent=23 // pred_region
          %285 = vsyncadd %s145, 16
        $region122: #{tpu_custom_call.1} parent=23 // pred_fallthru
          _
        %s286 = sadd.s32 %s141, 3
        %s287 = sld [smem:[#allocation2 + %s286]]
        %s288 = scalar_lea.vmem %s1, %s287
        %s289 = scalar_lea.vmem %s108, %s286 [#allocation5]
        %p291 = scmp.lt.u32.totalorder 1, 8
        %p292 = pneg %p291
        // Predicated region
        $region123: #{tpu_custom_call.1} parent=23 // pred_check
          _
        $region124: #{tpu_custom_call.1} parent=23 // pred_check_branch
          %294 = sbr.rel (%p291) target = $region126
        $region125: #{tpu_custom_call.1} parent=23 // pred_region
          %s309 = sand.u32 1, 7
          %p310 = scmp.eq.s32.totalorder %s309, 0
          %p311 = pneg %p310
          // Predicated region
          $region138: #{tpu_custom_call.1} parent=125 // pred_check
            _
          $region139: #{tpu_custom_call.1} parent=125 // pred_check_branch
            %313 = sbr.rel (%p310) target = $region141
          $region140: #{tpu_custom_call.1} parent=125 // pred_region
            %s314 = sand.u32 1, 7
            %s315 = ssub.s32 1, %s314
            %s316 = scalar_lea.vmem %s288, %s315
            %s317 = ssub.s32 1, %s314
            %s318 = scalar_lea.vmem %s289, %s317 [#allocation5]
            %s319 = sshllo.u32 0, %s314
            loop: start=0, step=1, limit=1
            $region142: #{tpu_custom_call.1} parent=140 // loop_pre_header
              _
            $region143: #{tpu_custom_call.1} parent=140 // loop_header
              %s321 = sphi 0, %s325
              %p322 = scmp.ge.s32.totalorder %s321, 1
              %s326 = sphi %s316, %s316
              %s327 = sphi %s318, %s318
            $region144: #{tpu_custom_call.1} parent=140 // loop_header_branch
              %324 = sbr.rel (%p322) target = $region148
            $region145: #{tpu_custom_call.1} parent=140 // loop_body
              %v328 = vld [vmem:[%s326] sm:%s319]
              %329 = vst [vmem:[%s327] sm:%s319] %v328
            $region146: #{tpu_custom_call.1} parent=140 // loop_footer
              %s325 = sadd.s32 1, %s321
            $region147: #{tpu_custom_call.1} parent=140 // loop_footer_branch
              %320 = sbr.rel target = $region143
            $region148: #{tpu_custom_call.1} parent=140 // loop_exit
              _
          $region141: #{tpu_custom_call.1} parent=125 // pred_fallthru
            _
        $region126: #{tpu_custom_call.1} parent=23 // pred_fallthru
          _
        // Predicated region
        $region127: #{tpu_custom_call.1} parent=23 // pred_check
          %p295 = pneg %p291
        $region128: #{tpu_custom_call.1} parent=23 // pred_check_branch
          %297 = sbr.rel (%p295) target = $region130
        $region129: #{tpu_custom_call.1} parent=23 // pred_region
          %s298 = sshllo.u32 0, 1
          loop: start=0, step=1, limit=1
          $region131: #{tpu_custom_call.1} parent=129 // loop_pre_header
            _
          $region132: #{tpu_custom_call.1} parent=129 // loop_header
            %s300 = sphi 0, %s304
            %p301 = scmp.ge.s32.totalorder %s300, 1
            %s305 = sphi %s288, %s288
            %s306 = sphi %s289, %s289
          $region133: #{tpu_custom_call.1} parent=129 // loop_header_branch
            %303 = sbr.rel (%p301) target = $region137
          $region134: #{tpu_custom_call.1} parent=129 // loop_body
            %v307 = vld [vmem:[%s305] sm:%s298]
            %308 = vst [vmem:[%s306] sm:%s298] %v307
          $region135: #{tpu_custom_call.1} parent=129 // loop_footer
            %s304 = sadd.s32 1, %s300
          $region136: #{tpu_custom_call.1} parent=129 // loop_footer_branch
            %299 = sbr.rel target = $region132
          $region137: #{tpu_custom_call.1} parent=129 // loop_exit
            _
        $region130: #{tpu_custom_call.1} parent=23 // pred_fallthru
          _
        // Predicated region
        $region149: #{tpu_custom_call.1} parent=23 // pred_check
          _
        $region150: #{tpu_custom_call.1} parent=23 // pred_check_branch
          %332 = sbr.rel (0) target = $region152
        $region151: #{tpu_custom_call.1} parent=23 // pred_region
          %333 = vsyncadd %s145, 16
        $region152: #{tpu_custom_call.1} parent=23 // pred_fallthru
          _
        %s334 = sadd.s32 %s141, 4
        %s335 = sld [smem:[#allocation2 + %s334]]
        %s336 = scalar_lea.vmem %s1, %s335
        %s337 = scalar_lea.vmem %s108, %s334 [#allocation5]
        %p339 = scmp.lt.u32.totalorder 1, 8
        %p340 = pneg %p339
        // Predicated region
        $region153: #{tpu_custom_call.1} parent=23 // pred_check
          _
        $region154: #{tpu_custom_call.1} parent=23 // pred_check_branch
          %342 = sbr.rel (%p339) target = $region156
        $region155: #{tpu_custom_call.1} parent=23 // pred_region
          %s357 = sand.u32 1, 7
          %p358 = scmp.eq.s32.totalorder %s357, 0
          %p359 = pneg %p358
          // Predicated region
          $region168: #{tpu_custom_call.1} parent=155 // pred_check
            _
          $region169: #{tpu_custom_call.1} parent=155 // pred_check_branch
            %361 = sbr.rel (%p358) target = $region171
          $region170: #{tpu_custom_call.1} parent=155 // pred_region
            %s362 = sand.u32 1, 7
            %s363 = ssub.s32 1, %s362
            %s364 = scalar_lea.vmem %s336, %s363
            %s365 = ssub.s32 1, %s362
            %s366 = scalar_lea.vmem %s337, %s365 [#allocation5]
            %s367 = sshllo.u32 0, %s362
            loop: start=0, step=1, limit=1
            $region172: #{tpu_custom_call.1} parent=170 // loop_pre_header
              _
            $region173: #{tpu_custom_call.1} parent=170 // loop_header
              %s369 = sphi 0, %s373
              %p370 = scmp.ge.s32.totalorder %s369, 1
              %s374 = sphi %s364, %s364
              %s375 = sphi %s366, %s366
            $region174: #{tpu_custom_call.1} parent=170 // loop_header_branch
              %372 = sbr.rel (%p370) target = $region178
            $region175: #{tpu_custom_call.1} parent=170 // loop_body
              %v376 = vld [vmem:[%s374] sm:%s367]
              %377 = vst [vmem:[%s375] sm:%s367] %v376
            $region176: #{tpu_custom_call.1} parent=170 // loop_footer
              %s373 = sadd.s32 1, %s369
            $region177: #{tpu_custom_call.1} parent=170 // loop_footer_branch
              %368 = sbr.rel target = $region173
            $region178: #{tpu_custom_call.1} parent=170 // loop_exit
              _
          $region171: #{tpu_custom_call.1} parent=155 // pred_fallthru
            _
        $region156: #{tpu_custom_call.1} parent=23 // pred_fallthru
          _
        // Predicated region
        $region157: #{tpu_custom_call.1} parent=23 // pred_check
          %p343 = pneg %p339
        $region158: #{tpu_custom_call.1} parent=23 // pred_check_branch
          %345 = sbr.rel (%p343) target = $region160
        $region159: #{tpu_custom_call.1} parent=23 // pred_region
          %s346 = sshllo.u32 0, 1
          loop: start=0, step=1, limit=1
          $region161: #{tpu_custom_call.1} parent=159 // loop_pre_header
            _
          $region162: #{tpu_custom_call.1} parent=159 // loop_header
            %s348 = sphi 0, %s352
            %p349 = scmp.ge.s32.totalorder %s348, 1
            %s353 = sphi %s336, %s336
            %s354 = sphi %s337, %s337
          $region163: #{tpu_custom_call.1} parent=159 // loop_header_branch
            %351 = sbr.rel (%p349) target = $region167
          $region164: #{tpu_custom_call.1} parent=159 // loop_body
            %v355 = vld [vmem:[%s353] sm:%s346]
            %356 = vst [vmem:[%s354] sm:%s346] %v355
          $region165: #{tpu_custom_call.1} parent=159 // loop_footer
            %s352 = sadd.s32 1, %s348
          $region166: #{tpu_custom_call.1} parent=159 // loop_footer_branch
            %347 = sbr.rel target = $region162
          $region167: #{tpu_custom_call.1} parent=159 // loop_exit
            _
        $region160: #{tpu_custom_call.1} parent=23 // pred_fallthru
          _
        // Predicated region
        $region179: #{tpu_custom_call.1} parent=23 // pred_check
          _
        $region180: #{tpu_custom_call.1} parent=23 // pred_check_branch
          %380 = sbr.rel (0) target = $region182
        $region181: #{tpu_custom_call.1} parent=23 // pred_region
          %381 = vsyncadd %s145, 16
        $region182: #{tpu_custom_call.1} parent=23 // pred_fallthru
          _
        %s382 = sadd.s32 %s141, 5
        %s383 = sld [smem:[#allocation2 + %s382]]
        %s384 = scalar_lea.vmem %s1, %s383
        %s385 = scalar_lea.vmem %s108, %s382 [#allocation5]
        %p387 = scmp.lt.u32.totalorder 1, 8
        %p388 = pneg %p387
        // Predicated region
        $region183: #{tpu_custom_call.1} parent=23 // pred_check
          _
        $region184: #{tpu_custom_call.1} parent=23 // pred_check_branch
          %390 = sbr.rel (%p387) target = $region186
        $region185: #{tpu_custom_call.1} parent=23 // pred_region
          %s405 = sand.u32 1, 7
          %p406 = scmp.eq.s32.totalorder %s405, 0
          %p407 = pneg %p406
          // Predicated region
          $region198: #{tpu_custom_call.1} parent=185 // pred_check
            _
          $region199: #{tpu_custom_call.1} parent=185 // pred_check_branch
            %409 = sbr.rel (%p406) target = $region201
          $region200: #{tpu_custom_call.1} parent=185 // pred_region
            %s410 = sand.u32 1, 7
            %s411 = ssub.s32 1, %s410
            %s412 = scalar_lea.vmem %s384, %s411
            %s413 = ssub.s32 1, %s410
            %s414 = scalar_lea.vmem %s385, %s413 [#allocation5]
            %s415 = sshllo.u32 0, %s410
            loop: start=0, step=1, limit=1
            $region202: #{tpu_custom_call.1} parent=200 // loop_pre_header
              _
            $region203: #{tpu_custom_call.1} parent=200 // loop_header
              %s417 = sphi 0, %s421
              %p418 = scmp.ge.s32.totalorder %s417, 1
              %s422 = sphi %s412, %s412
              %s423 = sphi %s414, %s414
            $region204: #{tpu_custom_call.1} parent=200 // loop_header_branch
              %420 = sbr.rel (%p418) target = $region208
            $region205: #{tpu_custom_call.1} parent=200 // loop_body
              %v424 = vld [vmem:[%s422] sm:%s415]
              %425 = vst [vmem:[%s423] sm:%s415] %v424
            $region206: #{tpu_custom_call.1} parent=200 // loop_footer
              %s421 = sadd.s32 1, %s417
            $region207: #{tpu_custom_call.1} parent=200 // loop_footer_branch
              %416 = sbr.rel target = $region203
            $region208: #{tpu_custom_call.1} parent=200 // loop_exit
              _
          $region201: #{tpu_custom_call.1} parent=185 // pred_fallthru
            _
        $region186: #{tpu_custom_call.1} parent=23 // pred_fallthru
          _
        // Predicated region
        $region187: #{tpu_custom_call.1} parent=23 // pred_check
          %p391 = pneg %p387
        $region188: #{tpu_custom_call.1} parent=23 // pred_check_branch
          %393 = sbr.rel (%p391) target = $region190
        $region189: #{tpu_custom_call.1} parent=23 // pred_region
          %s394 = sshllo.u32 0, 1
          loop: start=0, step=1, limit=1
          $region191: #{tpu_custom_call.1} parent=189 // loop_pre_header
            _
          $region192: #{tpu_custom_call.1} parent=189 // loop_header
            %s396 = sphi 0, %s400
            %p397 = scmp.ge.s32.totalorder %s396, 1
            %s401 = sphi %s384, %s384
            %s402 = sphi %s385, %s385
          $region193: #{tpu_custom_call.1} parent=189 // loop_header_branch
            %399 = sbr.rel (%p397) target = $region197
          $region194: #{tpu_custom_call.1} parent=189 // loop_body
            %v403 = vld [vmem:[%s401] sm:%s394]
            %404 = vst [vmem:[%s402] sm:%s394] %v403
          $region195: #{tpu_custom_call.1} parent=189 // loop_footer
            %s400 = sadd.s32 1, %s396
          $region196: #{tpu_custom_call.1} parent=189 // loop_footer_branch
            %395 = sbr.rel target = $region192
          $region197: #{tpu_custom_call.1} parent=189 // loop_exit
            _
        $region190: #{tpu_custom_call.1} parent=23 // pred_fallthru
          _
        // Predicated region
        $region209: #{tpu_custom_call.1} parent=23 // pred_check
          _
        $region210: #{tpu_custom_call.1} parent=23 // pred_check_branch
          %428 = sbr.rel (0) target = $region212
        $region211: #{tpu_custom_call.1} parent=23 // pred_region
          %429 = vsyncadd %s145, 16
        $region212: #{tpu_custom_call.1} parent=23 // pred_fallthru
          _
        %s430 = sadd.s32 %s141, 6
        %s431 = sld [smem:[#allocation2 + %s430]]
        %s432 = scalar_lea.vmem %s1, %s431
        %s433 = scalar_lea.vmem %s108, %s430 [#allocation5]
        %p435 = scmp.lt.u32.totalorder 1, 8
        %p436 = pneg %p435
        // Predicated region
        $region213: #{tpu_custom_call.1} parent=23 // pred_check
          _
        $region214: #{tpu_custom_call.1} parent=23 // pred_check_branch
          %438 = sbr.rel (%p435) target = $region216
        $region215: #{tpu_custom_call.1} parent=23 // pred_region
          %s453 = sand.u32 1, 7
          %p454 = scmp.eq.s32.totalorder %s453, 0
          %p455 = pneg %p454
          // Predicated region
          $region228: #{tpu_custom_call.1} parent=215 // pred_check
            _
          $region229: #{tpu_custom_call.1} parent=215 // pred_check_branch
            %457 = sbr.rel (%p454) target = $region231
          $region230: #{tpu_custom_call.1} parent=215 // pred_region
            %s458 = sand.u32 1, 7
            %s459 = ssub.s32 1, %s458
            %s460 = scalar_lea.vmem %s432, %s459
            %s461 = ssub.s32 1, %s458
            %s462 = scalar_lea.vmem %s433, %s461 [#allocation5]
            %s463 = sshllo.u32 0, %s458
            loop: start=0, step=1, limit=1
            $region232: #{tpu_custom_call.1} parent=230 // loop_pre_header
              _
            $region233: #{tpu_custom_call.1} parent=230 // loop_header
              %s465 = sphi 0, %s469
              %p466 = scmp.ge.s32.totalorder %s465, 1
              %s470 = sphi %s460, %s460
              %s471 = sphi %s462, %s462
            $region234: #{tpu_custom_call.1} parent=230 // loop_header_branch
              %468 = sbr.rel (%p466) target = $region238
            $region235: #{tpu_custom_call.1} parent=230 // loop_body
              %v472 = vld [vmem:[%s470] sm:%s463]
              %473 = vst [vmem:[%s471] sm:%s463] %v472
            $region236: #{tpu_custom_call.1} parent=230 // loop_footer
              %s469 = sadd.s32 1, %s465
            $region237: #{tpu_custom_call.1} parent=230 // loop_footer_branch
              %464 = sbr.rel target = $region233
            $region238: #{tpu_custom_call.1} parent=230 // loop_exit
              _
          $region231: #{tpu_custom_call.1} parent=215 // pred_fallthru
            _
        $region216: #{tpu_custom_call.1} parent=23 // pred_fallthru
          _
        // Predicated region
        $region217: #{tpu_custom_call.1} parent=23 // pred_check
          %p439 = pneg %p435
        $region218: #{tpu_custom_call.1} parent=23 // pred_check_branch
          %441 = sbr.rel (%p439) target = $region220
        $region219: #{tpu_custom_call.1} parent=23 // pred_region
          %s442 = sshllo.u32 0, 1
          loop: start=0, step=1, limit=1
          $region221: #{tpu_custom_call.1} parent=219 // loop_pre_header
            _
          $region222: #{tpu_custom_call.1} parent=219 // loop_header
            %s444 = sphi 0, %s448
            %p445 = scmp.ge.s32.totalorder %s444, 1
            %s449 = sphi %s432, %s432
            %s450 = sphi %s433, %s433
          $region223: #{tpu_custom_call.1} parent=219 // loop_header_branch
            %447 = sbr.rel (%p445) target = $region227
          $region224: #{tpu_custom_call.1} parent=219 // loop_body
            %v451 = vld [vmem:[%s449] sm:%s442]
            %452 = vst [vmem:[%s450] sm:%s442] %v451
          $region225: #{tpu_custom_call.1} parent=219 // loop_footer
            %s448 = sadd.s32 1, %s444
          $region226: #{tpu_custom_call.1} parent=219 // loop_footer_branch
            %443 = sbr.rel target = $region222
          $region227: #{tpu_custom_call.1} parent=219 // loop_exit
            _
        $region220: #{tpu_custom_call.1} parent=23 // pred_fallthru
          _
        // Predicated region
        $region239: #{tpu_custom_call.1} parent=23 // pred_check
          _
        $region240: #{tpu_custom_call.1} parent=23 // pred_check_branch
          %476 = sbr.rel (0) target = $region242
        $region241: #{tpu_custom_call.1} parent=23 // pred_region
          %477 = vsyncadd %s145, 16
        $region242: #{tpu_custom_call.1} parent=23 // pred_fallthru
          _
        %s478 = sadd.s32 %s141, 7
        %s479 = sld [smem:[#allocation2 + %s478]]
        %s480 = scalar_lea.vmem %s1, %s479
        %s481 = scalar_lea.vmem %s108, %s478 [#allocation5]
        %p483 = scmp.lt.u32.totalorder 1, 8
        %p484 = pneg %p483
        // Predicated region
        $region243: #{tpu_custom_call.1} parent=23 // pred_check
          _
        $region244: #{tpu_custom_call.1} parent=23 // pred_check_branch
          %486 = sbr.rel (%p483) target = $region246
        $region245: #{tpu_custom_call.1} parent=23 // pred_region
          %s501 = sand.u32 1, 7
          %p502 = scmp.eq.s32.totalorder %s501, 0
          %p503 = pneg %p502
          // Predicated region
          $region258: #{tpu_custom_call.1} parent=245 // pred_check
            _
          $region259: #{tpu_custom_call.1} parent=245 // pred_check_branch
            %505 = sbr.rel (%p502) target = $region261
          $region260: #{tpu_custom_call.1} parent=245 // pred_region
            %s506 = sand.u32 1, 7
            %s507 = ssub.s32 1, %s506
            %s508 = scalar_lea.vmem %s480, %s507
            %s509 = ssub.s32 1, %s506
            %s510 = scalar_lea.vmem %s481, %s509 [#allocation5]
            %s511 = sshllo.u32 0, %s506
            loop: start=0, step=1, limit=1
            $region262: #{tpu_custom_call.1} parent=260 // loop_pre_header
              _
            $region263: #{tpu_custom_call.1} parent=260 // loop_header
              %s513 = sphi 0, %s517
              %p514 = scmp.ge.s32.totalorder %s513, 1
              %s518 = sphi %s508, %s508
              %s519 = sphi %s510, %s510
            $region264: #{tpu_custom_call.1} parent=260 // loop_header_branch
              %516 = sbr.rel (%p514) target = $region268
            $region265: #{tpu_custom_call.1} parent=260 // loop_body
              %v520 = vld [vmem:[%s518] sm:%s511]
              %521 = vst [vmem:[%s519] sm:%s511] %v520
            $region266: #{tpu_custom_call.1} parent=260 // loop_footer
              %s517 = sadd.s32 1, %s513
            $region267: #{tpu_custom_call.1} parent=260 // loop_footer_branch
              %512 = sbr.rel target = $region263
            $region268: #{tpu_custom_call.1} parent=260 // loop_exit
              _
          $region261: #{tpu_custom_call.1} parent=245 // pred_fallthru
            _
        $region246: #{tpu_custom_call.1} parent=23 // pred_fallthru
          _
        // Predicated region
        $region247: #{tpu_custom_call.1} parent=23 // pred_check
          %p487 = pneg %p483
        $region248: #{tpu_custom_call.1} parent=23 // pred_check_branch
          %489 = sbr.rel (%p487) target = $region250
        $region249: #{tpu_custom_call.1} parent=23 // pred_region
          %s490 = sshllo.u32 0, 1
          loop: start=0, step=1, limit=1
          $region251: #{tpu_custom_call.1} parent=249 // loop_pre_header
            _
          $region252: #{tpu_custom_call.1} parent=249 // loop_header
            %s492 = sphi 0, %s496
            %p493 = scmp.ge.s32.totalorder %s492, 1
            %s497 = sphi %s480, %s480
            %s498 = sphi %s481, %s481
          $region253: #{tpu_custom_call.1} parent=249 // loop_header_branch
            %495 = sbr.rel (%p493) target = $region257
          $region254: #{tpu_custom_call.1} parent=249 // loop_body
            %v499 = vld [vmem:[%s497] sm:%s490]
            %500 = vst [vmem:[%s498] sm:%s490] %v499
          $region255: #{tpu_custom_call.1} parent=249 // loop_footer
            %s496 = sadd.s32 1, %s492
          $region256: #{tpu_custom_call.1} parent=249 // loop_footer_branch
            %491 = sbr.rel target = $region252
          $region257: #{tpu_custom_call.1} parent=249 // loop_exit
            _
        $region250: #{tpu_custom_call.1} parent=23 // pred_fallthru
          _
        // Predicated region
        $region269: #{tpu_custom_call.1} parent=23 // pred_check
          _
        $region270: #{tpu_custom_call.1} parent=23 // pred_check_branch
          %524 = sbr.rel (0) target = $region272
        $region271: #{tpu_custom_call.1} parent=23 // pred_region
          %525 = vsyncadd %s145, 16
        $region272: #{tpu_custom_call.1} parent=23 // pred_fallthru
          _
        %p526 = scmp.gt.s32.totalorder %s22, 0
        // Predicated region
        $region273: #{tpu_custom_call.1} parent=23 // pred_check
          %p527 = pneg %p526
        $region274: #{tpu_custom_call.1} parent=23 // pred_check_branch
          %529 = sbr.rel (%p527) target = $region276
        $region275: #{tpu_custom_call.1} parent=23 // pred_region
          %s530 = ssub.s32 1, %s114
          %s531 = scalar_lea.sflag [#allocation3], %s530
          %s532 = smul.u32 8, 1
          %s533 = sshll.u32 %s532, 4
          %534 = dma.done %s531, %s533
        $region276: #{tpu_custom_call.1} parent=23 // pred_fallthru
          _
        // Predicated region
        $region277: #{tpu_custom_call.1} parent=23 // pred_check
          %p535 = pneg %p115
        $region278: #{tpu_custom_call.1} parent=23 // pred_check_branch
          %537 = sbr.rel (%p535) target = $region280
        $region279: #{tpu_custom_call.1} parent=23 // pred_region
          %s538 = smul.u32 8, 1
          %s539 = sshll.u32 %s538, 4
          %540 = dma.done %s145, %s539
        $region280: #{tpu_custom_call.1} parent=23 // pred_fallthru
          _
        %s541 = sand.u32 %s58, 1
        %s542 = scalar_lea.sflag [#allocation6], %s541
        %s543 = sand.u32 %s58, 1
        %s544 = smul.addr %s543, 32
        %s545 = scalar_lea.vmem [#allocation5], %s544
        // Predicated region
        $region281: #{tpu_custom_call.1} parent=23 // pred_check
          %p546 = pneg %p68
        $region282: #{tpu_custom_call.1} parent=23 // pred_check_branch
          %548 = sbr.rel (%p546) target = $region284
        $region283: #{tpu_custom_call.1} parent=23 // pred_region
          %s550 = ssub.s32 512, 512
          %551 = vsyncadd %s542, %s550
          %s552 = smul.addr %s21, 4
          %s553 = smul.addr %s552, 128
          %s554 = scalar_lea.hbm %s3, %s553
          %s555 = sshll.u32 %s545, 4
          %s556 = int_to_ptr.vmem [resolvable:$true] %s555
          %561 = dma.vmem_to_hbm [thread:$0]  %s556, 512, %s554, %s542, 128, 128, 8
        $region284: #{tpu_custom_call.1} parent=23 // pred_fallthru
          _
      $region24: #{tpu_custom_call.1} parent=5 // pred_fallthru
        _
      %p562 = scmp.le.s32.totalorder 2, %s12
      // Predicated region
      $region285: #{tpu_custom_call.1} parent=5 // pred_check
        %p563 = pneg %p562
      $region286: #{tpu_custom_call.1} parent=5 // pred_check_branch
        %565 = sbr.rel (%p563) target = $region288
      $region287: #{tpu_custom_call.1} parent=5 // pred_region
        %s566 = ssub.s32 %s12, 2
        // Predicated region
        $region289: #{tpu_custom_call.1} parent=287 // pred_check
          %p567 = pneg %p74
        $region290: #{tpu_custom_call.1} parent=287 // pred_check_branch
          %569 = sbr.rel (%p567) target = $region292
        $region291: #{tpu_custom_call.1} parent=287 // pred_region
          %s570 = sand.u32 %s59, 1
          %s571 = scalar_lea.sflag [#allocation6], %s570
          %s572 = sand.u32 %s59, 1
          %s573 = smul.addr %s572, 32
          %s574 = scalar_lea.vmem [#allocation5], %s573
          %575 = dma.done %s571, 512
        $region292: #{tpu_custom_call.1} parent=287 // pred_fallthru
          _
      $region288: #{tpu_custom_call.1} parent=5 // pred_fallthru
        _
    $region6: #{tpu_custom_call.1} parent=1 // loop_footer
      %s16 = sadd.s32 1, %s12
    $region7: #{tpu_custom_call.1} parent=1 // loop_footer_branch
      %11 = sbr.rel target = $region3
    $region8: #{tpu_custom_call.1} parent=1 // loop_exit
      _
    %576 = vsyncpa [#allocation6], 1
    %s577 = scalar_lea.sflag [#allocation6], 1
    %578 = vsyncpa %s577, 1
  %579 = vsyncmov [#allocation3]
  %s580 = vpop.sfrf %579
  %p581 = scmp.eq.s32.totalorder %s580, 0
  %p582 = pneg %p581
  %584 = shalt.err (%p582)
  %s585 = scalar_lea.sflag [#allocation3], 1
  %586 = vsyncmov %s585
  %s587 = vpop.sfrf %586
  %p588 = scmp.eq.s32.totalorder %s587, 0
  %p589 = pneg %p588
  %591 = shalt.err (%p589)
  %592 = vsyncmov [#allocation4]
  %s593 = vpop.sfrf %592
  %p594 = scmp.eq.s32.totalorder %s593, 0
  %p595 = pneg %p594
  %597 = shalt.err (%p595)

</llo_original>
